<compile_context>
chip_gen: v7x
topology: tpu7x:2x2x1
jax: 0.10.0
libtpu: 0.0.40
codegen_flags: <defaults>
</compile_context>

<pallas_src>
import functools

import jax
import jax.numpy as jnp
from jax.experimental import pallas as pl
from jax.experimental.pallas import tpu as pltpu

AUDIO_H = 32
VIDEO_H = 128
TEXT_H = 128
FUSION_H = AUDIO_H + VIDEO_H + TEXT_H   # 288
POST_FUSION_DIM = 32


def _cdiv(a, b):
    return -(-a // b)


def _round_up(x, m):
    return _cdiv(x, m) * m


def _pick_batch_tile(batch):
    """Batch tile (multiple of 8 f32 sublanes), capped at 2048 rows.

    For batch > 1024 we force at least 2 balanced grid steps so that
    dimension_semantics=("parallel",) lets v7x's two TensorCores split the work.
    VMEM footprint at tb=2048 (f32 tiles, lane-padded to 128, double-buffered):
      inputs ~6 MiB + output ~2 MiB + weights ~40 KB  << 32 MiB scoped limit.
    """
    cap = 2048
    if batch <= 1024:
        return _round_up(batch, 8)
    n_steps = max(2, _cdiv(batch, cap))
    return _round_up(_cdiv(batch, n_steps), 8)


def _lf_dnn_kernel(a_ref, v_ref, t_ref,
                   w1a_ref, w1v_ref, w1t_ref, b1_ref,
                   w2_ref, b2_ref, w3_ref, b3_ref,
                   out_ref):
    """Fused 3-layer MLP on one (TB, ...) batch tile.

    Activations arrive in their HBM dtype (f32) and are cast to bf16 in-register
    (VPU cast is free relative to the DMA).  Layer 1 is the sum of three
    per-modality MXU matmuls == concat([a, v, t]) @ W1, so no in-kernel concat.
    """
    a = a_ref[...].astype(jnp.bfloat16)
    v = v_ref[...].astype(jnp.bfloat16)
    t = t_ref[...].astype(jnp.bfloat16)

    # Layer 1: (TB, 32)@(32,32) + (TB,128)@(128,32) + (TB,128)@(128,32), f32 acc.
    h1 = jnp.dot(a, w1a_ref[...], preferred_element_type=jnp.float32)
    h1 = h1 + jnp.dot(v, w1v_ref[...], preferred_element_type=jnp.float32)
    h1 = h1 + jnp.dot(t, w1t_ref[...], preferred_element_type=jnp.float32)
    h1 = jnp.maximum(h1 + b1_ref[...], 0.0)

    # Layer 2: (TB, 32) @ (32, 32) + b2 -> ReLU
    h2 = jnp.dot(h1.astype(jnp.bfloat16), w2_ref[...],
                 preferred_element_type=jnp.float32)
    h2 = jnp.maximum(h2 + b2_ref[...], 0.0)

    # Layer 3: (TB, 32) @ (32, C) + b3
    out = jnp.dot(h2.astype(jnp.bfloat16), w3_ref[...],
                  preferred_element_type=jnp.float32)
    out_ref[...] = out + b3_ref[...]


@functools.partial(jax.jit, static_argnames=("num_classes",))
def lf_dnn_block(audio_h, video_h, text_h, params, *, num_classes):
    """Fused LF_DNN_Block forward pass.

    audio_h: (B, 32), video_h: (B, 128), text_h: (B, 128) float32 activations
    (read directly by the kernel; cast to bf16 happens in-kernel, no extra HBM pass).
    params: dict with w1 (288,32), b1 (1,32), w2 (32,32), b2 (1,32),
            w3 (32,C), b3 (1,C) float32, (in_features, out_features) layout.
    Returns float32 logits of shape (B, num_classes).
    """
    batch = audio_h.shape[0]

    # Split W1 into per-modality row blocks (concat order: audio, video, text).
    # Weight casts are tiny one-time ops (~20 KB total); biases stay f32.
    w1 = params["w1"].astype(jnp.bfloat16)
    w1_a = w1[:AUDIO_H]
    w1_v = w1[AUDIO_H:AUDIO_H + VIDEO_H]
    w1_t = w1[AUDIO_H + VIDEO_H:]
    w2 = params["w2"].astype(jnp.bfloat16)
    w3 = params["w3"].astype(jnp.bfloat16)
    b1 = params["b1"].astype(jnp.float32)
    b2 = params["b2"].astype(jnp.float32)
    b3 = params["b3"].astype(jnp.float32)

    tb = _pick_batch_tile(batch)
    grid = (_cdiv(batch, tb),)

    tile = lambda feat: pl.BlockSpec((tb, feat), lambda i: (i, 0))
    # Constant index_map -> block index never changes -> Pallas DMAs these once
    # and keeps them VMEM-resident across grid steps (no per-step re-copy).
    pinned = lambda shape: pl.BlockSpec(shape, lambda i: (0, 0))

    return pl.pallas_call(
        _lf_dnn_kernel,
        out_shape=jax.ShapeDtypeStruct((batch, num_classes), jnp.float32),
        grid=grid,
        in_specs=[
            tile(AUDIO_H),                               # audio  (TB, 32)  f32
            tile(VIDEO_H),                               # video  (TB, 128) f32
            tile(TEXT_H),                                # text   (TB, 128) f32
            pinned((AUDIO_H, POST_FUSION_DIM)),          # W1[audio rows]
            pinned((VIDEO_H, POST_FUSION_DIM)),          # W1[video rows]
            pinned((TEXT_H, POST_FUSION_DIM)),           # W1[text rows]
            pinned((1, POST_FUSION_DIM)),                # b1
            pinned((POST_FUSION_DIM, POST_FUSION_DIM)),  # W2
            pinned((1, POST_FUSION_DIM)),                # b2
            pinned((POST_FUSION_DIM, num_classes)),      # W3
            pinned((1, num_classes)),                    # b3
        ],
        out_specs=pl.BlockSpec((tb, num_classes), lambda i: (i, 0)),
        compiler_params=pltpu.CompilerParams(
            dimension_semantics=("parallel",),           # megacore batch split (v7x)
            vmem_limit_bytes=32 * 1024 * 1024,           # explicit (v5e default is 16 MiB)
        ),
    )(audio_h, video_h, text_h, w1_a, w1_v, w1_t, b1, w2, b2, w3, b3)


def init_params(key, num_classes):
    """Deterministic parameter init (Kaiming-uniform-ish, like nn.Linear default)."""
    keys = jax.random.split(key, 6)

    def linear_init(kw, kb, fan_in, fan_out):
        bound = 1.0 / jnp.sqrt(float(fan_in))
        w = jax.random.uniform(kw, (fan_in, fan_out), jnp.float32, -bound, bound)
        b = jax.random.uniform(kb, (1, fan_out), jnp.float32, -bound, bound)
        return w, b

    w1, b1 = linear_init(keys[0], keys[1], FUSION_H, POST_FUSION_DIM)
    w2, b2 = linear_init(keys[2], keys[3], POST_FUSION_DIM, POST_FUSION_DIM)
    w3, b3 = linear_init(keys[4], keys[5], POST_FUSION_DIM, num_classes)
    return {"w1": w1, "b1": b1, "w2": w2, "b2": b2, "w3": w3, "b3": b3}


def _reference(audio_h, video_h, text_h, params):
    """Pure-JAX reference using the same bf16-operand / f32-accumulate arithmetic."""
    a = audio_h.astype(jnp.bfloat16)
    v = video_h.astype(jnp.bfloat16)
    t = text_h.astype(jnp.bfloat16)
    fusion = jnp.concatenate([a, v, t], axis=-1)
    x = jnp.dot(fusion, params["w1"].astype(jnp.bfloat16),
                preferred_element_type=jnp.float32) + params["b1"]
    x = jax.nn.relu(x)
    x = jnp.dot(x.astype(jnp.bfloat16), params["w2"].astype(jnp.bfloat16),
                preferred_element_type=jnp.float32) + params["b2"]
    x = jax.nn.relu(x)
    return jnp.dot(x.astype(jnp.bfloat16), params["w3"].astype(jnp.bfloat16),
                   preferred_element_type=jnp.float32) + params["b3"]


if __name__ == "__main__":
    num_classes = 3
    batch = 8

    key = jax.random.PRNGKey(0)
    k_a, k_v, k_t, k_p = jax.random.split(key, 4)

    # f32 activations, consumed directly by the kernel (bf16 cast happens in-kernel).
    audio_h = jax.random.normal(k_a, (batch, AUDIO_H), jnp.float32)
    video_h = jax.random.normal(k_v, (batch, VIDEO_H), jnp.float32)
    text_h = jax.random.normal(k_t, (batch, TEXT_H), jnp.float32)
    params = init_params(k_p, num_classes)

    out = lf_dnn_block(audio_h, video_h, text_h, params, num_classes=num_classes)
    out = jax.block_until_ready(out)

    ref = _reference(audio_h, video_h, text_h, params)
    assert out.shape == (batch, num_classes), out.shape
    assert jnp.allclose(out, ref, atol=1e-2, rtol=1e-2), "mismatch vs JAX reference"

    print("KERNEL_OK")
</pallas_src>

<mosaic_0001>
module attributes {stable_mosaic.version = 11 : i64} {
  func.func @_lf_dnn_kernel(%arg0: i32, %arg1: memref<8x32xf32, #tpu.memory_space<vmem>>, %arg2: memref<8x128xf32, #tpu.memory_space<vmem>>, %arg3: memref<8x128xf32, #tpu.memory_space<vmem>>, %arg4: memref<32x32xbf16, #tpu.memory_space<vmem>>, %arg5: memref<128x32xbf16, #tpu.memory_space<vmem>>, %arg6: memref<128x32xbf16, #tpu.memory_space<vmem>>, %arg7: memref<1x32xf32, #tpu.memory_space<vmem>>, %arg8: memref<32x32xbf16, #tpu.memory_space<vmem>>, %arg9: memref<1x32xf32, #tpu.memory_space<vmem>>, %arg10: memref<32x3xbf16, #tpu.memory_space<vmem>>, %arg11: memref<1x3xf32, #tpu.memory_space<vmem>>, %arg12: memref<8x3xf32, #tpu.memory_space<vmem>>) attributes {dimension_semantics = [#tpu.dimension_semantics<parallel>], iteration_bounds = array<i64: 1>, scalar_prefetch = 0 : i64, scratch_operands = 0 : i64, tpu.core_type = #tpu.core_type<tc>, window_params = [{transform_indices = @transform_0, window_bounds = array<i64: 8, 32>}, {transform_indices = @transform_1, window_bounds = array<i64: 8, 128>}, {transform_indices = @transform_2, window_bounds = array<i64: 8, 128>}, {pipeline_mode = #tpu.pipeline_mode<synchronous>, transform_indices = @transform_3, window_bounds = array<i64: 32, 32>}, {pipeline_mode = #tpu.pipeline_mode<synchronous>, transform_indices = @transform_4, window_bounds = array<i64: 128, 32>}, {pipeline_mode = #tpu.pipeline_mode<synchronous>, transform_indices = @transform_5, window_bounds = array<i64: 128, 32>}, {pipeline_mode = #tpu.pipeline_mode<synchronous>, transform_indices = @transform_6, window_bounds = array<i64: 1, 32>}, {pipeline_mode = #tpu.pipeline_mode<synchronous>, transform_indices = @transform_7, window_bounds = array<i64: 32, 32>}, {pipeline_mode = #tpu.pipeline_mode<synchronous>, transform_indices = @transform_8, window_bounds = array<i64: 1, 32>}, {pipeline_mode = #tpu.pipeline_mode<synchronous>, transform_indices = @transform_9, window_bounds = array<i64: 32, 3>}, {pipeline_mode = #tpu.pipeline_mode<synchronous>, transform_indices = @transform_10, window_bounds = array<i64: 1, 3>}, {transform_indices = @transform_11, window_bounds = array<i64: 8, 3>}]} {
    %c0 = arith.constant 0 : index
    %c0_0 = arith.constant 0 : index
    %0 = vector.load %arg1[%c0, %c0_0] : memref<8x32xf32, #tpu.memory_space<vmem>>, vector<8x32xf32>
    %1 = arith.truncf %0 : vector<8x32xf32> to vector<8x32xbf16>
    %c0_1 = arith.constant 0 : index
    %c0_2 = arith.constant 0 : index
    %2 = vector.load %arg2[%c0_1, %c0_2] : memref<8x128xf32, #tpu.memory_space<vmem>>, vector<8x128xf32>
    %3 = arith.truncf %2 : vector<8x128xf32> to vector<8x128xbf16>
    %c0_3 = arith.constant 0 : index
    %c0_4 = arith.constant 0 : index
    %4 = vector.load %arg3[%c0_3, %c0_4] : memref<8x128xf32, #tpu.memory_space<vmem>>, vector<8x128xf32>
    %5 = arith.truncf %4 : vector<8x128xf32> to vector<8x128xbf16>
    %c0_5 = arith.constant 0 : index
    %c0_6 = arith.constant 0 : index
    %6 = vector.load %arg4[%c0_5, %c0_6] : memref<32x32xbf16, #tpu.memory_space<vmem>>, vector<32x32xbf16>
    %cst = arith.constant dense<0.000000e+00> : vector<8x32xf32>
    %7 = tpu.matmul %1, %6, %cst {dimension_numbers = #tpu.dot_dimension_numbers<[1], [0], [0], [1], [0, 0, 1, 1], [], []>} : vector<8x32xbf16>, vector<32x32xbf16>, vector<8x32xf32> -> vector<8x32xf32>
    %c0_7 = arith.constant 0 : index
    %c0_8 = arith.constant 0 : index
    %8 = vector.load %arg5[%c0_7, %c0_8] : memref<128x32xbf16, #tpu.memory_space<vmem>>, vector<128x32xbf16>
    %cst_9 = arith.constant dense<0.000000e+00> : vector<8x32xf32>
    %9 = tpu.matmul %3, %8, %cst_9 {dimension_numbers = #tpu.dot_dimension_numbers<[1], [0], [0], [1], [0, 0, 1, 1], [], []>} : vector<8x128xbf16>, vector<128x32xbf16>, vector<8x32xf32> -> vector<8x32xf32>
    %10 = arith.addf %7, %9 : vector<8x32xf32>
    %c0_10 = arith.constant 0 : index
    %c0_11 = arith.constant 0 : index
    %11 = vector.load %arg6[%c0_10, %c0_11] : memref<128x32xbf16, #tpu.memory_space<vmem>>, vector<128x32xbf16>
    %cst_12 = arith.constant dense<0.000000e+00> : vector<8x32xf32>
    %12 = tpu.matmul %5, %11, %cst_12 {dimension_numbers = #tpu.dot_dimension_numbers<[1], [0], [0], [1], [0, 0, 1, 1], [], []>} : vector<8x128xbf16>, vector<128x32xbf16>, vector<8x32xf32> -> vector<8x32xf32>
    %13 = arith.addf %10, %12 : vector<8x32xf32>
    %c0_13 = arith.constant 0 : index
    %c0_14 = arith.constant 0 : index
    %14 = vector.load %arg7[%c0_13, %c0_14] : memref<1x32xf32, #tpu.memory_space<vmem>>, vector<1x32xf32>
    %15 = vector.broadcast %14 : vector<1x32xf32> to vector<8x32xf32>
    %16 = arith.addf %13, %15 : vector<8x32xf32>
    %cst_15 = arith.constant 0.000000e+00 : f32
    %17 = vector.broadcast %cst_15 : f32 to vector<8x32xf32>
    %18 = arith.maximumf %16, %17 : vector<8x32xf32>
    %19 = arith.truncf %18 : vector<8x32xf32> to vector<8x32xbf16>
    %c0_16 = arith.constant 0 : index
    %c0_17 = arith.constant 0 : index
    %20 = vector.load %arg8[%c0_16, %c0_17] : memref<32x32xbf16, #tpu.memory_space<vmem>>, vector<32x32xbf16>
    %cst_18 = arith.constant dense<0.000000e+00> : vector<8x32xf32>
    %21 = tpu.matmul %19, %20, %cst_18 {dimension_numbers = #tpu.dot_dimension_numbers<[1], [0], [0], [1], [0, 0, 1, 1], [], []>} : vector<8x32xbf16>, vector<32x32xbf16>, vector<8x32xf32> -> vector<8x32xf32>
    %c0_19 = arith.constant 0 : index
    %c0_20 = arith.constant 0 : index
    %22 = vector.load %arg9[%c0_19, %c0_20] : memref<1x32xf32, #tpu.memory_space<vmem>>, vector<1x32xf32>
    %23 = vector.broadcast %22 : vector<1x32xf32> to vector<8x32xf32>
    %24 = arith.addf %21, %23 : vector<8x32xf32>
    %cst_21 = arith.constant 0.000000e+00 : f32
    %25 = vector.broadcast %cst_21 : f32 to vector<8x32xf32>
    %26 = arith.maximumf %24, %25 : vector<8x32xf32>
    %27 = arith.truncf %26 : vector<8x32xf32> to vector<8x32xbf16>
    %c0_22 = arith.constant 0 : index
    %c0_23 = arith.constant 0 : index
    %28 = vector.load %arg10[%c0_22, %c0_23] : memref<32x3xbf16, #tpu.memory_space<vmem>>, vector<32x3xbf16>
    %cst_24 = arith.constant dense<0.000000e+00> : vector<8x3xf32>
    %29 = tpu.matmul %27, %28, %cst_24 {dimension_numbers = #tpu.dot_dimension_numbers<[1], [0], [0], [1], [0, 0, 1, 1], [], []>} : vector<8x32xbf16>, vector<32x3xbf16>, vector<8x3xf32> -> vector<8x3xf32>
    %c0_25 = arith.constant 0 : index
    %c0_26 = arith.constant 0 : index
    %30 = vector.load %arg11[%c0_25, %c0_26] : memref<1x3xf32, #tpu.memory_space<vmem>>, vector<1x3xf32>
    %31 = vector.broadcast %30 : vector<1x3xf32> to vector<8x3xf32>
    %32 = arith.addf %29, %31 : vector<8x3xf32>
    %c0_27 = arith.constant 0 : index
    %c0_28 = arith.constant 0 : index
    %33 = vector.load %arg12[%c0_27, %c0_28] : memref<8x3xf32, #tpu.memory_space<vmem>>, vector<8x3xf32>
    tpu.vector_store %arg12[%c0_27, %c0_28], %32 {strides = array<i32>} : memref<8x3xf32, #tpu.memory_space<vmem>>, vector<8x3xf32>,
    return
  }
  func.func @transform_0(%arg0: i32) -> (i32, i32) {
    %c0_i32 = arith.constant 0 : i32
    %c0_i32_0 = arith.constant 0 : i32
    return %arg0, %c0_i32 : i32, i32
  }
  func.func @transform_1(%arg0: i32) -> (i32, i32) {
    %c0_i32 = arith.constant 0 : i32
    %c0_i32_0 = arith.constant 0 : i32
    return %arg0, %c0_i32 : i32, i32
  }
  func.func @transform_2(%arg0: i32) -> (i32, i32) {
    %c0_i32 = arith.constant 0 : i32
    %c0_i32_0 = arith.constant 0 : i32
    return %arg0, %c0_i32 : i32, i32
  }
  func.func @transform_3(%arg0: i32) -> (i32, i32) {
    %c0_i32 = arith.constant 0 : i32
    %c0_i32_0 = arith.constant 0 : i32
    %c0_i32_1 = arith.constant 0 : i32
    return %c0_i32, %c0_i32_0 : i32, i32
  }
  func.func @transform_4(%arg0: i32) -> (i32, i32) {
    %c0_i32 = arith.constant 0 : i32
    %c0_i32_0 = arith.constant 0 : i32
    %c0_i32_1 = arith.constant 0 : i32
    return %c0_i32, %c0_i32_0 : i32, i32
  }
  func.func @transform_5(%arg0: i32) -> (i32, i32) {
    %c0_i32 = arith.constant 0 : i32
    %c0_i32_0 = arith.constant 0 : i32
    %c0_i32_1 = arith.constant 0 : i32
    return %c0_i32, %c0_i32_0 : i32, i32
  }
  func.func @transform_6(%arg0: i32) -> (i32, i32) {
    %c0_i32 = arith.constant 0 : i32
    %c0_i32_0 = arith.constant 0 : i32
    %c0_i32_1 = arith.constant 0 : i32
    return %c0_i32, %c0_i32_0 : i32, i32
  }
  func.func @transform_7(%arg0: i32) -> (i32, i32) {
    %c0_i32 = arith.constant 0 : i32
    %c0_i32_0 = arith.constant 0 : i32
    %c0_i32_1 = arith.constant 0 : i32
    return %c0_i32, %c0_i32_0 : i32, i32
  }
  func.func @transform_8(%arg0: i32) -> (i32, i32) {
    %c0_i32 = arith.constant 0 : i32
    %c0_i32_0 = arith.constant 0 : i32
    %c0_i32_1 = arith.constant 0 : i32
    return %c0_i32, %c0_i32_0 : i32, i32
  }
  func.func @transform_9(%arg0: i32) -> (i32, i32) {
    %c0_i32 = arith.constant 0 : i32
    %c0_i32_0 = arith.constant 0 : i32
    %c0_i32_1 = arith.constant 0 : i32
    return %c0_i32, %c0_i32_0 : i32, i32
  }
  func.func @transform_10(%arg0: i32) -> (i32, i32) {
    %c0_i32 = arith.constant 0 : i32
    %c0_i32_0 = arith.constant 0 : i32
    %c0_i32_1 = arith.constant 0 : i32
    return %c0_i32, %c0_i32_0 : i32, i32
  }
  func.func @transform_11(%arg0: i32) -> (i32, i32) {
    %c0_i32 = arith.constant 0 : i32
    %c0_i32_0 = arith.constant 0 : i32
    return %arg0, %c0_i32 : i32, i32
  }
}

</mosaic_0001>

<llo_original>
// kernel: lf_dnn_block.1
$region0: #{lf_dnn_block.1}
  #allocation0 [shape = 'u32[]', space=smem, size = 0x4, offset = 0x4, fixed_abs, tag = 'smem constant byte address 0x4 - core index']
  #allocation1 [shape = 'u32[144,128]{1,0:T(1,128)}', space=vmem, size = 0x12000, scoped, tag = 'internal scratch']
  %s0 = inlined_call_operand.vmem [shape: f32[8,32], index: 0, kind: input, shape index: {}]
  %s1 = inlined_call_operand.vmem [shape: f32[8,128], index: 1, kind: input, shape index: {}]
  %s2 = inlined_call_operand.vmem [shape: f32[8,128], index: 2, kind: input, shape index: {}]
  %s3 = inlined_call_operand.vmem [shape: bf16[32,32], index: 3, kind: input, shape index: {}]
  %s4 = inlined_call_operand.vmem [shape: bf16[128,32], index: 4, kind: input, shape index: {}]
  %s5 = inlined_call_operand.vmem [shape: bf16[128,32], index: 5, kind: input, shape index: {}]
  %s6 = inlined_call_operand.vmem [shape: f32[1,32], index: 6, kind: input, shape index: {}]
  %s7 = inlined_call_operand.vmem [shape: bf16[32,32], index: 7, kind: input, shape index: {}]
  %s8 = inlined_call_operand.vmem [shape: f32[1,32], index: 8, kind: input, shape index: {}]
  %s9 = inlined_call_operand.vmem [shape: bf16[32,3], index: 9, kind: input, shape index: {}]
  %s10 = inlined_call_operand.vmem [shape: f32[1,3], index: 10, kind: input, shape index: {}]
  %s11 = inlined_call_operand.vmem [shape: f32[8,3], index: 11, kind: output, shape index: {}]
  %s12 = sld [smem:[#allocation0]]
  $region54: #{lf_dnn_block.1} parent=0
    _
  %s14 = ssub.s32 1, %s12
  %s15 = scalar_select 0, %s14, %s12
  // Predicated region
  $region2: #{lf_dnn_block.1} parent=0 // pred_check
    _
  $region3: #{lf_dnn_block.1} parent=0 // pred_check_branch
    %17 = sbr.rel (0) target = $region5
  $region4: #{lf_dnn_block.1} parent=0 // pred_region
    _
  $region5: #{lf_dnn_block.1} parent=0 // pred_fallthru
    _
  // Predicated region
  $region6: #{lf_dnn_block.1} parent=0 // pred_check
    _
  $region7: #{lf_dnn_block.1} parent=0 // pred_check_branch
    %19 = sbr.rel (0) target = $region9
  $region8: #{lf_dnn_block.1} parent=0 // pred_region
    _
  $region9: #{lf_dnn_block.1} parent=0 // pred_fallthru
    _
  // Predicated region
  $region10: #{lf_dnn_block.1} parent=0 // pred_check
    _
  $region11: #{lf_dnn_block.1} parent=0 // pred_check_branch
    %21 = sbr.rel (0) target = $region13
  $region12: #{lf_dnn_block.1} parent=0 // pred_region
    _
  $region13: #{lf_dnn_block.1} parent=0 // pred_fallthru
    _
  // Predicated region
  $region14: #{lf_dnn_block.1} parent=0 // pred_check
    _
  $region15: #{lf_dnn_block.1} parent=0 // pred_check_branch
    %23 = sbr.rel (0) target = $region17
  $region16: #{lf_dnn_block.1} parent=0 // pred_region
    _
  $region17: #{lf_dnn_block.1} parent=0 // pred_fallthru
    _
  // Predicated region
  $region18: #{lf_dnn_block.1} parent=0 // pred_check
    _
  $region19: #{lf_dnn_block.1} parent=0 // pred_check_branch
    %25 = sbr.rel (0) target = $region21
  $region20: #{lf_dnn_block.1} parent=0 // pred_region
    _
  $region21: #{lf_dnn_block.1} parent=0 // pred_fallthru
    _
  // Predicated region
  $region22: #{lf_dnn_block.1} parent=0 // pred_check
    _
  $region23: #{lf_dnn_block.1} parent=0 // pred_check_branch
    %27 = sbr.rel (0) target = $region25
  $region24: #{lf_dnn_block.1} parent=0 // pred_region
    _
  $region25: #{lf_dnn_block.1} parent=0 // pred_fallthru
    _
  // Predicated region
  $region26: #{lf_dnn_block.1} parent=0 // pred_check
    _
  $region27: #{lf_dnn_block.1} parent=0 // pred_check_branch
    %29 = sbr.rel (0) target = $region29
  $region28: #{lf_dnn_block.1} parent=0 // pred_region
    _
  $region29: #{lf_dnn_block.1} parent=0 // pred_fallthru
    _
  // Predicated region
  $region30: #{lf_dnn_block.1} parent=0 // pred_check
    _
  $region31: #{lf_dnn_block.1} parent=0 // pred_check_branch
    %31 = sbr.rel (0) target = $region33
  $region32: #{lf_dnn_block.1} parent=0 // pred_region
    _
  $region33: #{lf_dnn_block.1} parent=0 // pred_fallthru
    _
  // Predicated region
  $region34: #{lf_dnn_block.1} parent=0 // pred_check
    _
  $region35: #{lf_dnn_block.1} parent=0 // pred_check_branch
    %33 = sbr.rel (0) target = $region37
  $region36: #{lf_dnn_block.1} parent=0 // pred_region
    _
  $region37: #{lf_dnn_block.1} parent=0 // pred_fallthru
    _
  // Predicated region
  $region38: #{lf_dnn_block.1} parent=0 // pred_check
    _
  $region39: #{lf_dnn_block.1} parent=0 // pred_check_branch
    %35 = sbr.rel (0) target = $region41
  $region40: #{lf_dnn_block.1} parent=0 // pred_region
    _
  $region41: #{lf_dnn_block.1} parent=0 // pred_fallthru
    _
  // Predicated region
  $region42: #{lf_dnn_block.1} parent=0 // pred_check
    _
  $region43: #{lf_dnn_block.1} parent=0 // pred_check_branch
    %37 = sbr.rel (0) target = $region45
  $region44: #{lf_dnn_block.1} parent=0 // pred_region
    _
  $region45: #{lf_dnn_block.1} parent=0 // pred_fallthru
    _
  %v39 = vld [vmem:[%s0] sm:$0xff]
  %v40 = vpack.c.bf16 %v39, %v39
  %v41 = vld [vmem:[%s1] sm:$0xff]
  %v42 = vpack.c.bf16 %v41, %v41
  %v43 = vld [vmem:[%s2] sm:$0xff]
  %v44 = vpack.c.bf16 %v43, %v43
  %v45 = vld [vmem:[%s3] sm:$0xf]
  %v46 = vld [vmem:[%s3 + $0x4] sm:$0xf]
  %v47 = vld [vmem:[%s3 + $0x8] sm:$0xf]
  %v48 = vld [vmem:[%s3 + $0xc] sm:$0xf]
  %v49 = vld [vmem:[%s4] sm:$0xf]
  %v50 = vld [vmem:[%s4 + $0x4] sm:$0xf]
  %v51 = vld [vmem:[%s4 + $0x8] sm:$0xf]
  %v52 = vld [vmem:[%s4 + $0xc] sm:$0xf]
  %v53 = vld [vmem:[%s4 + $0x10] sm:$0xf]
  %v54 = vld [vmem:[%s4 + $0x14] sm:$0xf]
  %v55 = vld [vmem:[%s4 + $0x18] sm:$0xf]
  %v56 = vld [vmem:[%s4 + $0x1c] sm:$0xf]
  %v57 = vld [vmem:[%s4 + $0x20] sm:$0xf]
  %v58 = vld [vmem:[%s4 + $0x24] sm:$0xf]
  %v59 = vld [vmem:[%s4 + $0x28] sm:$0xf]
  %v60 = vld [vmem:[%s4 + $0x2c] sm:$0xf]
  %v61 = vld [vmem:[%s4 + $0x30] sm:$0xf]
  %v62 = vld [vmem:[%s4 + $0x34] sm:$0xf]
  %v63 = vld [vmem:[%s4 + $0x38] sm:$0xf]
  %v64 = vld [vmem:[%s4 + $0x3c] sm:$0xf]
  %v81 = vunpack.c.l.b16 %v49
  %v82 = vunpack.c.l.b16 %v50
  %v83 = vunpack.c.l.b16 %v51
  %v84 = vunpack.c.l.b16 %v52
  %v85 = vunpack.c.l.b16 %v53
  %v86 = vunpack.c.l.b16 %v54
  %v87 = vunpack.c.l.b16 %v55
  %v88 = vunpack.c.l.b16 %v56
  %v89 = vunpack.c.l.b16 %v57
  %v90 = vunpack.c.l.b16 %v58
  %v91 = vunpack.c.l.b16 %v59
  %v92 = vunpack.c.l.b16 %v60
  %v93 = vunpack.c.l.b16 %v61
  %v94 = vunpack.c.l.b16 %v62
  %v95 = vunpack.c.l.b16 %v63
  %v96 = vunpack.c.l.b16 %v64
  %v97 = vpack.c.b16 %v82, %v81
  %v98 = vpack.c.b16 %v84, %v83
  %v99 = vpack.c.b16 %v86, %v85
  %v100 = vpack.c.b16 %v88, %v87
  %v101 = vpack.c.b16 %v90, %v89
  %v102 = vpack.c.b16 %v92, %v91
  %v103 = vpack.c.b16 %v94, %v93
  %v104 = vpack.c.b16 %v96, %v95
  %113 = vmatprep.subr.bf16.mxu0 0
  %114 = vmatpush1.bf16.msra.mxu0 %v97
  %115 = vmatprep.subr.bf16.mxu0 0
  %116 = vmatpush1.bf16.msra.mxu0 %v98
  %117 = vmatprep.subr.bf16.mxu0 0
  %118 = vmatpush1.bf16.msra.mxu0 %v99
  %119 = vmatprep.subr.bf16.mxu0 0
  %120 = vmatpush1.bf16.msra.mxu0 %v100
  %121 = vmatprep.subr.bf16.mxu0 0
  %122 = vmatpush1.bf16.msra.mxu0 %v101
  %123 = vmatprep.subr.bf16.mxu0 0
  %124 = vmatpush1.bf16.msra.mxu0 %v102
  %125 = vmatprep.subr.bf16.mxu0 0
  %126 = vmatpush1.bf16.msra.mxu0 %v103
  %127 = vmatprep.subr.bf16.mxu0 0
  %128 = vmatpush1.bf16.msra.mxu0 %v104
  %129 = vmatprep.subr.bf16.mxu0 0
  %130 = vmatpush1.bf16.msra.mxu0 0
  %131 = vmatprep.subr.bf16.mxu0 0
  %132 = vmatpush1.bf16.msra.mxu0 0
  %133 = vmatprep.subr.bf16.mxu0 0
  %134 = vmatpush1.bf16.msra.mxu0 0
  %135 = vmatprep.subr.bf16.mxu0 0
  %136 = vmatpush1.bf16.msra.mxu0 0
  %137 = vmatprep.subr.bf16.mxu0 0
  %138 = vmatpush1.bf16.msra.mxu0 0
  %139 = vmatprep.subr.bf16.mxu0 0
  %140 = vmatpush1.bf16.msra.mxu0 0
  %141 = vmatprep.subr.bf16.mxu0 0
  %142 = vmatpush1.bf16.msra.mxu0 0
  %143 = vmatprep.subr.bf16.mxu0 0
  %144 = vmatpush1.bf16.msra.mxu0 0
  %145 = vmatprep.mubr.bf16.mxu0 0
  %146 = vmatmul.mubr.bf16.gmra.mrb[0].mxu0 %v42
  %v147 = vpop.f32.mrb[0].mxu0
  %v148 = vadd.f32 0.0, %v147
  %v149 = vpop.f32.mrb[0].mxu0
  %v150 = vpop.f32.mrb[0].mxu0
  %v151 = vpop.f32.mrb[0].mxu0
  %152 = vdwg.mxu0
  %v157 = vunpack.c.l.b16 %v45
  %v158 = vunpack.c.l.b16 %v46
  %v159 = vunpack.c.l.b16 %v47
  %v160 = vunpack.c.l.b16 %v48
  %v161 = vpack.c.b16 %v158, %v157
  %v162 = vpack.c.b16 %v160, %v159
  %vm165 = vcmask 261120
  %v167 = vsel %vm165, %v40, 0
  %169 = vmatprep.subr.bf16.mxu0 0
  %170 = vmatpush1.bf16.msra.mxu0 %v161
  %171 = vmatprep.subr.bf16.mxu0 0
  %172 = vmatpush1.bf16.msra.mxu0 %v162
  %173 = vmatprep.subr.bf16.mxu0 0
  %174 = vmatpush1.bf16.msra.mxu0 0
  %175 = vmatprep.subr.bf16.mxu0 0
  %176 = vmatpush1.bf16.msra.mxu0 0
  %177 = vmatprep.subr.bf16.mxu0 0
  %178 = vmatpush1.bf16.msra.mxu0 0
  %179 = vmatprep.subr.bf16.mxu0 0
  %180 = vmatpush1.bf16.msra.mxu0 0
  %181 = vmatprep.subr.bf16.mxu0 0
  %182 = vmatpush1.bf16.msra.mxu0 0
  %183 = vmatprep.subr.bf16.mxu0 0
  %184 = vmatpush1.bf16.msra.mxu0 0
  %185 = vmatprep.subr.bf16.mxu0 0
  %186 = vmatpush1.bf16.msra.mxu0 0
  %187 = vmatprep.subr.bf16.mxu0 0
  %188 = vmatpush1.bf16.msra.mxu0 0
  %189 = vmatprep.subr.bf16.mxu0 0
  %190 = vmatpush1.bf16.msra.mxu0 0
  %191 = vmatprep.subr.bf16.mxu0 0
  %192 = vmatpush1.bf16.msra.mxu0 0
  %193 = vmatprep.subr.bf16.mxu0 0
  %194 = vmatpush1.bf16.msra.mxu0 0
  %195 = vmatprep.subr.bf16.mxu0 0
  %196 = vmatpush1.bf16.msra.mxu0 0
  %197 = vmatprep.subr.bf16.mxu0 0
  %198 = vmatpush1.bf16.msra.mxu0 0
  %199 = vmatprep.subr.bf16.mxu0 0
  %200 = vmatpush1.bf16.msra.mxu0 0
  %201 = vmatprep.mubr.bf16.mxu0 0
  %202 = vmatmul.mubr.bf16.gmra.mrb[0].mxu0 %v167
  %v203 = vpop.f32.mrb[0].mxu0
  %v204 = vadd.f32 %v148, %v203
  %v205 = vpop.f32.mrb[0].mxu0
  %v206 = vpop.f32.mrb[0].mxu0
  %v207 = vpop.f32.mrb[0].mxu0
  %208 = vdwg.mxu0
  %v209 = vld [vmem:[%s5] sm:$0xf]
  %v210 = vld [vmem:[%s5 + $0x4] sm:$0xf]
  %v211 = vld [vmem:[%s5 + $0x8] sm:$0xf]
  %v212 = vld [vmem:[%s5 + $0xc] sm:$0xf]
  %v213 = vld [vmem:[%s5 + $0x10] sm:$0xf]
  %v214 = vld [vmem:[%s5 + $0x14] sm:$0xf]
  %v215 = vld [vmem:[%s5 + $0x18] sm:$0xf]
  %v216 = vld [vmem:[%s5 + $0x1c] sm:$0xf]
  %v217 = vld [vmem:[%s5 + $0x20] sm:$0xf]
  %v218 = vld [vmem:[%s5 + $0x24] sm:$0xf]
  %v219 = vld [vmem:[%s5 + $0x28] sm:$0xf]
  %v220 = vld [vmem:[%s5 + $0x2c] sm:$0xf]
  %v221 = vld [vmem:[%s5 + $0x30] sm:$0xf]
  %v222 = vld [vmem:[%s5 + $0x34] sm:$0xf]
  %v223 = vld [vmem:[%s5 + $0x38] sm:$0xf]
  %v224 = vld [vmem:[%s5 + $0x3c] sm:$0xf]
  %v241 = vunpack.c.l.b16 %v209
  %v242 = vunpack.c.l.b16 %v210
  %v243 = vunpack.c.l.b16 %v211
  %v244 = vunpack.c.l.b16 %v212
  %v245 = vunpack.c.l.b16 %v213
  %v246 = vunpack.c.l.b16 %v214
  %v247 = vunpack.c.l.b16 %v215
  %v248 = vunpack.c.l.b16 %v216
  %v249 = vunpack.c.l.b16 %v217
  %v250 = vunpack.c.l.b16 %v218
  %v251 = vunpack.c.l.b16 %v219
  %v252 = vunpack.c.l.b16 %v220
  %v253 = vunpack.c.l.b16 %v221
  %v254 = vunpack.c.l.b16 %v222
  %v255 = vunpack.c.l.b16 %v223
  %v256 = vunpack.c.l.b16 %v224
  %v257 = vpack.c.b16 %v242, %v241
  %v258 = vpack.c.b16 %v244, %v243
  %v259 = vpack.c.b16 %v246, %v245
  %v260 = vpack.c.b16 %v248, %v247
  %v261 = vpack.c.b16 %v250, %v249
  %v262 = vpack.c.b16 %v252, %v251
  %v263 = vpack.c.b16 %v254, %v253
  %v264 = vpack.c.b16 %v256, %v255
  %273 = vmatprep.subr.bf16.mxu0 0
  %274 = vmatpush1.bf16.msra.mxu0 %v257
  %275 = vmatprep.subr.bf16.mxu0 0
  %276 = vmatpush1.bf16.msra.mxu0 %v258
  %277 = vmatprep.subr.bf16.mxu0 0
  %278 = vmatpush1.bf16.msra.mxu0 %v259
  %279 = vmatprep.subr.bf16.mxu0 0
  %280 = vmatpush1.bf16.msra.mxu0 %v260
  %281 = vmatprep.subr.bf16.mxu0 0
  %282 = vmatpush1.bf16.msra.mxu0 %v261
  %283 = vmatprep.subr.bf16.mxu0 0
  %284 = vmatpush1.bf16.msra.mxu0 %v262
  %285 = vmatprep.subr.bf16.mxu0 0
  %286 = vmatpush1.bf16.msra.mxu0 %v263
  %287 = vmatprep.subr.bf16.mxu0 0
  %288 = vmatpush1.bf16.msra.mxu0 %v264
  %289 = vmatprep.subr.bf16.mxu0 0
  %290 = vmatpush1.bf16.msra.mxu0 0
  %291 = vmatprep.subr.bf16.mxu0 0
  %292 = vmatpush1.bf16.msra.mxu0 0
  %293 = vmatprep.subr.bf16.mxu0 0
  %294 = vmatpush1.bf16.msra.mxu0 0
  %295 = vmatprep.subr.bf16.mxu0 0
  %296 = vmatpush1.bf16.msra.mxu0 0
  %297 = vmatprep.subr.bf16.mxu0 0
  %298 = vmatpush1.bf16.msra.mxu0 0
  %299 = vmatprep.subr.bf16.mxu0 0
  %300 = vmatpush1.bf16.msra.mxu0 0
  %301 = vmatprep.subr.bf16.mxu0 0
  %302 = vmatpush1.bf16.msra.mxu0 0
  %303 = vmatprep.subr.bf16.mxu0 0
  %304 = vmatpush1.bf16.msra.mxu0 0
  %305 = vmatprep.mubr.bf16.mxu0 0
  %306 = vmatmul.mubr.bf16.gmra.mrb[0].mxu0 %v44
  %v307 = vpop.f32.mrb[0].mxu0
  %v308 = vadd.f32 0.0, %v307
  %v309 = vpop.f32.mrb[0].mxu0
  %v310 = vpop.f32.mrb[0].mxu0
  %v311 = vpop.f32.mrb[0].mxu0
  %312 = vdwg.mxu0
  %v313 = vadd.f32 %v204, %v308
  %v314 = vld [vmem:[%s6] sm:$0x1]
  %v316 = vlaneseq
  %v317 = vshrl.u32 %v316, 7
  %v318 = vsub.s32 0, %v317
  %v319 = vrot.slane %v314, %v318
  %v321 = vadd.f32 %v313, %v319
  %v322 = vmax.f32 %v321, 0.0
  %v323 = vpack.c.bf16 %v322, %v322
  %v324 = vld [vmem:[%s7] sm:$0xf]
  %v325 = vld [vmem:[%s7 + $0x4] sm:$0xf]
  %v326 = vld [vmem:[%s7 + $0x8] sm:$0xf]
  %v327 = vld [vmem:[%s7 + $0xc] sm:$0xf]
  %v328 = vld [vmem:[%s8] sm:$0x1]
  %v330 = vlaneseq
  %v331 = vshrl.u32 %v330, 7
  %v332 = vsub.s32 0, %v331
  %v333 = vrot.slane %v328, %v332
  %v339 = vunpack.c.l.b16 %v324
  %v340 = vunpack.c.l.b16 %v325
  %v341 = vunpack.c.l.b16 %v326
  %v342 = vunpack.c.l.b16 %v327
  %v343 = vpack.c.b16 %v340, %v339
  %v344 = vpack.c.b16 %v342, %v341
  %v348 = vsel %vm165, %v323, 0
  %350 = vmatprep.subr.bf16.mxu0 0
  %351 = vmatpush1.bf16.msra.mxu0 %v343
  %352 = vmatprep.subr.bf16.mxu0 0
  %353 = vmatpush1.bf16.msra.mxu0 %v344
  %354 = vmatprep.subr.bf16.mxu0 0
  %355 = vmatpush1.bf16.msra.mxu0 0
  %356 = vmatprep.subr.bf16.mxu0 0
  %357 = vmatpush1.bf16.msra.mxu0 0
  %358 = vmatprep.subr.bf16.mxu0 0
  %359 = vmatpush1.bf16.msra.mxu0 0
  %360 = vmatprep.subr.bf16.mxu0 0
  %361 = vmatpush1.bf16.msra.mxu0 0
  %362 = vmatprep.subr.bf16.mxu0 0
  %363 = vmatpush1.bf16.msra.mxu0 0
  %364 = vmatprep.subr.bf16.mxu0 0
  %365 = vmatpush1.bf16.msra.mxu0 0
  %366 = vmatprep.subr.bf16.mxu0 0
  %367 = vmatpush1.bf16.msra.mxu0 0
  %368 = vmatprep.subr.bf16.mxu0 0
  %369 = vmatpush1.bf16.msra.mxu0 0
  %370 = vmatprep.subr.bf16.mxu0 0
  %371 = vmatpush1.bf16.msra.mxu0 0
  %372 = vmatprep.subr.bf16.mxu0 0
  %373 = vmatpush1.bf16.msra.mxu0 0
  %374 = vmatprep.subr.bf16.mxu0 0
  %375 = vmatpush1.bf16.msra.mxu0 0
  %376 = vmatprep.subr.bf16.mxu0 0
  %377 = vmatpush1.bf16.msra.mxu0 0
  %378 = vmatprep.subr.bf16.mxu0 0
  %379 = vmatpush1.bf16.msra.mxu0 0
  %380 = vmatprep.subr.bf16.mxu0 0
  %381 = vmatpush1.bf16.msra.mxu0 0
  %382 = vmatprep.mubr.bf16.mxu0 0
  %383 = vmatmul.mubr.bf16.gmra.mrb[0].mxu0 %v348
  %v384 = vpop.f32.mrb[0].mxu0
  %v385 = vadd.f32 %v333, %v384
  %v386 = vpop.f32.mrb[0].mxu0
  %v387 = vpop.f32.mrb[0].mxu0
  %v388 = vpop.f32.mrb[0].mxu0
  %389 = vdwg.mxu0
  %v390 = vmax.f32 %v385, 0.0
  %v391 = vpack.c.bf16 %v390, %v390
  %v392 = vld [vmem:[%s9] sm:$0xf]
  %v393 = vld [vmem:[%s9 + $0x4] sm:$0xf]
  %v394 = vld [vmem:[%s9 + $0x8] sm:$0xf]
  %v395 = vld [vmem:[%s9 + $0xc] sm:$0xf]
  %v396 = vld [vmem:[%s10] sm:$0x1]
  %v398 = vlaneseq
  %v399 = vshrl.u32 %v398, 7
  %v400 = vsub.s32 0, %v399
  %v401 = vrot.slane %v396, %v400
  %v407 = vunpack.c.l.b16 %v392
  %v408 = vunpack.c.l.b16 %v393
  %v409 = vunpack.c.l.b16 %v394
  %v410 = vunpack.c.l.b16 %v395
  %v411 = vpack.c.b16 %v408, %v407
  %v412 = vpack.c.b16 %v410, %v409
  %v416 = vsel %vm165, %v391, 0
  %418 = vmatprep.subr.bf16.mxu0 0
  %419 = vmatpush1.bf16.msra.mxu0 %v411
  %420 = vmatprep.subr.bf16.mxu0 0
  %421 = vmatpush1.bf16.msra.mxu0 %v412
  %422 = vmatprep.subr.bf16.mxu0 0
  %423 = vmatpush1.bf16.msra.mxu0 0
  %424 = vmatprep.subr.bf16.mxu0 0
  %425 = vmatpush1.bf16.msra.mxu0 0
  %426 = vmatprep.subr.bf16.mxu0 0
  %427 = vmatpush1.bf16.msra.mxu0 0
  %428 = vmatprep.subr.bf16.mxu0 0
  %429 = vmatpush1.bf16.msra.mxu0 0
  %430 = vmatprep.subr.bf16.mxu0 0
  %431 = vmatpush1.bf16.msra.mxu0 0
  %432 = vmatprep.subr.bf16.mxu0 0
  %433 = vmatpush1.bf16.msra.mxu0 0
  %434 = vmatprep.subr.bf16.mxu0 0
  %435 = vmatpush1.bf16.msra.mxu0 0
  %436 = vmatprep.subr.bf16.mxu0 0
  %437 = vmatpush1.bf16.msra.mxu0 0
  %438 = vmatprep.subr.bf16.mxu0 0
  %439 = vmatpush1.bf16.msra.mxu0 0
  %440 = vmatprep.subr.bf16.mxu0 0
  %441 = vmatpush1.bf16.msra.mxu0 0
  %442 = vmatprep.subr.bf16.mxu0 0
  %443 = vmatpush1.bf16.msra.mxu0 0
  %444 = vmatprep.subr.bf16.mxu0 0
  %445 = vmatpush1.bf16.msra.mxu0 0
  %446 = vmatprep.subr.bf16.mxu0 0
  %447 = vmatpush1.bf16.msra.mxu0 0
  %448 = vmatprep.subr.bf16.mxu0 0
  %449 = vmatpush1.bf16.msra.mxu0 0
  %450 = vmatprep.mubr.bf16.mxu0 0
  %451 = vmatmul.mubr.bf16.gmra.mrb[0].mxu0 %v416
  %v452 = vpop.f32.mrb[0].mxu0
  %v453 = vadd.f32 %v401, %v452
  %v454 = vpop.f32.mrb[0].mxu0
  %v455 = vpop.f32.mrb[0].mxu0
  %v456 = vpop.f32.mrb[0].mxu0
  %457 = vdwg.mxu0
  %vm458 = vcmask 23552
  %459 = vst.msk [vmem:[%s11] sm:$0xff] %vm458, %v453
  // Predicated region
  $region46: #{lf_dnn_block.1} parent=0 // pred_check
    _
  $region47: #{lf_dnn_block.1} parent=0 // pred_check_branch
    %461 = sbr.rel (0) target = $region49
  $region48: #{lf_dnn_block.1} parent=0 // pred_region
    _
  $region49: #{lf_dnn_block.1} parent=0 // pred_fallthru
    _
  // Predicated region
  $region50: #{lf_dnn_block.1} parent=0 // pred_check
    _
  $region51: #{lf_dnn_block.1} parent=0 // pred_check_branch
    %463 = sbr.rel (0) target = $region53
  $region52: #{lf_dnn_block.1} parent=0 // pred_region
    _
  $region53: #{lf_dnn_block.1} parent=0 // pred_fallthru
    _

</llo_original>
